<compile_context>
chip_gen: v6e
topology: v6e:2x2x1
jax: 0.10.0
libtpu: 0.0.40
codegen_flags: <defaults>
</compile_context>

<pallas_src>
import numpy as np
import jax
import jax.numpy as jnp
from jax.experimental import pallas as pl
from jax.experimental.pallas import tpu as pltpu


def _round_up(x, m):
    return (x + m - 1) // m * m


def _vmem_capacity_bytes(default=64 * 1024 * 1024):
    """Physical VMEM (conservative 64 MiB fallback covers v7x)."""
    try:
        info_fn = getattr(pltpu, "get_tpu_info", None)
        if info_fn is not None:
            cap = getattr(info_fn(), "vmem_capacity_bytes", None)
            if cap:
                return int(cap)
    except Exception:
        pass
    return default


# --------------------------------------------------------------------------- #
# Kernel 1: streamed class-aggregation  acc[split] += f_norm^T @ onehot        #
# --------------------------------------------------------------------------- #
def make_agg_kernel(compute_dtype):
    def kernel(f_ref, lbl_ref, acc_ref):
        # acc_ref block: (1, F_pad, C_pad) f32, resident across the "arbitrary"
        # step axis (same block index for every k of this split).
        @pl.when(pl.program_id(1) == 0)
        def _init():
            acc_ref[...] = jnp.zeros_like(acc_ref)

        c_pad = acc_ref.shape[-1]

        # L2-normalize the feature tile: rsqrt on the EUP + one VPU multiply.
        # Padded (all-zero) rows stay exactly zero: 0 * rsqrt(1e-24) == 0.
        f = f_ref[...].astype(jnp.float32)                          # (tile_n, F_pad)
        ss = jnp.sum(f * f, axis=1, keepdims=True)
        fn = (f * jax.lax.rsqrt(jnp.maximum(ss, 1e-24))).astype(compute_dtype)

        # One-hot rebuilt in-kernel from the int32 label tile; (1, C) iota row is
        # broadcast against the (tile_n, 1) label column, emitted in bf16.
        cls = jax.lax.broadcasted_iota(jnp.int32, (1, c_pad), 1)    # (1, C_pad)
        oh = (lbl_ref[...] == cls).astype(compute_dtype)            # (tile_n, C_pad)

        # Reassociated aggregation: acc[F, C] += f^T @ onehot (contraction over
        # tile_n), bf16 operands, f32 accumulation.
        acc_ref[0] += jax.lax.dot_general(
            fn, oh,
            dimension_numbers=(((0,), (0,)), ((), ())),
            preferred_element_type=jnp.float32)

    return kernel


# --------------------------------------------------------------------------- #
# Kernel 2: tiny epilogue -- queries, temperature, masked softmax, NLL         #
# --------------------------------------------------------------------------- #
def make_epilogue_kernel(inv_batch):
    def kernel(x_ref, acc_ref, scale_ref, mask_ref, tgt_ref, loss_ref):
        x = x_ref[...].astype(jnp.float32)                          # (B_pad, F_pad)
        xs = jnp.sum(x * x, axis=1, keepdims=True)
        xn = x * jax.lax.rsqrt(jnp.maximum(xs, 1e-24))

        acc = jnp.sum(acc_ref[...], axis=0)                         # (F_pad, C_pad)

        # (B, C) class-averaged, temperature-scaled similarities.
        sim = jnp.dot(xn, acc, preferred_element_type=jnp.float32)
        sim = sim * scale_ref[...]                                  # mask/(temp*counts)

        # Masked softmax (no row-max subtraction, matching the reference; with
        # unit-norm features |sim| <= 1/temp so exp() stays finite in f32).
        mask = mask_ref[...]
        exps = jnp.exp(sim) * mask
        sums = jnp.sum(exps, axis=1, keepdims=True) + 1e-6
        logp = jnp.log(exps / sums + 1e-6)

        # nll_loss(reduction='mean'): -mean_b logp[b, target[b]]
        per_sample = -jnp.sum(logp * tgt_ref[...], axis=1, keepdims=True)
        loss_ref[0, 0] = jnp.sum(per_sample) * inv_batch

    return kernel


# --------------------------------------------------------------------------- #
# Wrapper                                                                      #
# --------------------------------------------------------------------------- #
def hybrid_memory_loss(inputs, features, labels, indexes, *, temp=0.05,
                       tile_n=None, bank_dtype=jnp.bfloat16,
                       compute_dtype=jnp.bfloat16, num_splits=2):
    """Forward pass of HybridMemory: returns the scalar NLL loss."""
    B, F = inputs.shape
    N, _ = features.shape
    # labels.max()+1 -- requires concrete labels (they are a module buffer).
    C = int(np.asarray(labels).max()) + 1

    # Pad lane/sublane dims for dense vreg/MXU use; padding is mathematically inert.
    F_pad = _round_up(F, 128)
    C_pad = _round_up(C, 128)
    B_pad = _round_up(B, 8)

    bpe = jnp.dtype(bank_dtype).itemsize
    vmem_cap = _vmem_capacity_bytes()

    # VMEM cost per streamed row (double-buffered): feature row + lane-padded label.
    lbl_row_bytes = 4 * 128
    per_row = 2 * (F_pad * bpe + lbl_row_bytes)

    if tile_n is None:
        # Use roughly a third of physical VMEM for the stream buffers
        # (~21 MiB on v7x's 64 MiB, ~42 MiB on v5e/v6e's 128 MiB).
        stream_budget = min(max(vmem_cap // 3, 16 * 1024 * 1024), 48 * 1024 * 1024)
        tile_n = stream_budget // per_row
    # Round to a multiple of 128 (bf16 sublane tiling safe) and clamp.
    tile_n = _round_up(max(int(tile_n), 128), 128)
    tile_n = int(min(tile_n, 8192, max(128, _round_up(N, 128))))

    # Split the N reduction into num_splits partial accumulators (parallel axis;
    # uses both TensorCores on v7x, near-free serial loop on v5e/v6e).
    num_splits = max(1, int(num_splits))
    tiles = pl.cdiv(N, tile_n)
    num_splits = min(num_splits, tiles)
    tiles = _round_up(tiles, num_splits)
    steps = tiles // num_splits
    N_pad = tiles * tile_n

    labels_i32 = jnp.asarray(labels, dtype=jnp.int32)
    indexes = jnp.asarray(indexes, dtype=jnp.int32)

    # Host-side tiny per-class tensors.
    counts = jnp.zeros((C_pad,), jnp.float32).at[labels_i32].add(1.0)
    mask = (counts > 0).astype(jnp.float32)
    scale = (mask / (temp * jnp.maximum(counts, 1.0))).reshape(1, C_pad)
    mask = mask.reshape(1, C_pad)
    tgt = jax.nn.one_hot(labels_i32[indexes], C_pad, dtype=jnp.float32)     # (B, C_pad)
    tgt = jnp.zeros((B_pad, C_pad), jnp.float32).at[:B].set(tgt)

    # Padded queries / memory bank (zero rows/cols are inert -- no in-kernel masking).
    x_p = jnp.zeros((B_pad, F_pad), jnp.float32).at[:B, :F].set(
        inputs.astype(jnp.float32))
    f_p = jnp.zeros((N_pad, F_pad), bank_dtype).at[:N, :F].set(
        features.astype(bank_dtype))
    labels_2d = jnp.zeros((N_pad, 1), jnp.int32).at[:N, 0].set(labels_i32)

    # ---- kernel 1: class aggregation ----
    est1 = (tile_n * per_row                       # double-buffered streams
            + 2 * F_pad * C_pad * 4                # resident accumulator block (+wb)
            + (1 << 20))
    vmem_limit1 = int(min(max(est1 + (8 << 20), 32 << 20),
                          max(vmem_cap - (12 << 20), 32 << 20)))

    def feat_map(s, k, _steps=steps):
        return (s * _steps + k, 0)

    def lbl_map(s, k, _steps=steps):
        return (s * _steps + k, 0)

    acc = pl.pallas_call(
        make_agg_kernel(compute_dtype),
        out_shape=jax.ShapeDtypeStruct((num_splits, F_pad, C_pad), jnp.float32),
        grid_spec=pltpu.PrefetchScalarGridSpec(
            num_scalar_prefetch=0,
            grid=(num_splits, steps),
            in_specs=[
                pl.BlockSpec((tile_n, F_pad), feat_map),    # features tile (streamed)
                pl.BlockSpec((tile_n, 1), lbl_map),         # labels tile (streamed)
            ],
            out_specs=pl.BlockSpec((1, F_pad, C_pad), lambda s, k: (s, 0, 0)),
        ),
        compiler_params=pltpu.CompilerParams(
            dimension_semantics=("parallel", "arbitrary"),
            vmem_limit_bytes=vmem_limit1,
        ),
    )(f_p, labels_2d)

    # ---- kernel 2: tiny epilogue (runs once) ----
    est2 = 4 * (B_pad * F_pad + (num_splits + 1) * F_pad * C_pad
                + 3 * B_pad * C_pad + 2 * C_pad) + (1 << 20)
    vmem_limit2 = int(min(max(2 * est2, 16 << 20),
                          max(vmem_cap - (8 << 20), 16 << 20)))

    loss = pl.pallas_call(
        make_epilogue_kernel(1.0 / B),
        out_shape=jax.ShapeDtypeStruct((1, 1), jnp.float32),
        grid_spec=pltpu.PrefetchScalarGridSpec(
            num_scalar_prefetch=0,
            grid=(1,),
            in_specs=[
                pl.BlockSpec((B_pad, F_pad), lambda i: (0, 0)),            # queries
                pl.BlockSpec((num_splits, F_pad, C_pad), lambda i: (0, 0, 0)),  # partial accs
                pl.BlockSpec((1, C_pad), lambda i: (0, 0)),                # scale
                pl.BlockSpec((1, C_pad), lambda i: (0, 0)),                # class mask
                pl.BlockSpec((B_pad, C_pad), lambda i: (0, 0)),            # target one-hot
            ],
            out_specs=pl.BlockSpec((1, 1), lambda i: (0, 0)),
        ),
        compiler_params=pltpu.CompilerParams(
            dimension_semantics=("arbitrary",),
            vmem_limit_bytes=vmem_limit2,
        ),
    )(x_p, acc, scale, mask, tgt)
    return loss[0, 0]


# --------------------------------------------------------------------------- #
# Pure-JAX reference (replicates the PyTorch forward math, with optional        #
# quantization matching the kernel's bank/compute dtypes)                      #
# --------------------------------------------------------------------------- #
def _l2norm_rows(v, eps=1e-12):
    n = jnp.sqrt(jnp.sum(v * v, axis=1, keepdims=True))
    return v / jnp.maximum(n, eps)


def reference_loss(inputs, features, labels, indexes, temp=0.05,
                   bank_dtype=jnp.float32, compute_dtype=jnp.float32):
    B = inputs.shape[0]
    C = int(np.asarray(labels).max()) + 1
    xn = _l2norm_rows(inputs.astype(jnp.float32))
    f = features.astype(bank_dtype).astype(jnp.float32)
    fn = _l2norm_rows(f).astype(compute_dtype).astype(jnp.float32)
    scores = (xn @ fn.T) / temp                                    # (B, N)
    oh = jax.nn.one_hot(labels, C, dtype=jnp.float32)              # (N, C)
    sim = scores @ oh                                              # (B, C)
    counts = oh.sum(axis=0, keepdims=True)
    mask = (counts > 0).astype(jnp.float32)
    sim = sim / (mask * counts + (1.0 - mask))
    exps = jnp.exp(sim) * mask
    sm = exps / (exps.sum(axis=1, keepdims=True) + 1e-6)
    logp = jnp.log(sm + 1e-6)
    targets = labels[indexes]
    return -jnp.mean(logp[jnp.arange(B), targets])


if __name__ == "__main__":
    # Small, module-consistent shapes (B queries against an N-slot memory bank).
    B, F, N, C = 8, 128, 512, 16
    temp = 0.05

    key = jax.random.PRNGKey(0)
    k_in, k_feat, k_lbl, k_idx = jax.random.split(key, 4)

    inputs = jax.random.normal(k_in, (B, F), dtype=jnp.float32)
    # register_buffer('features', zeros) in __init__ -- use deterministic random
    # values instead so the forward math is non-degenerate.
    features = jax.random.normal(k_feat, (N, F), dtype=jnp.float32)
    labels = jax.random.randint(k_lbl, (N,), 0, C, dtype=jnp.int32)
    indexes = jax.random.randint(k_idx, (B,), 0, N, dtype=jnp.int32)

    # 1) exact f32 path, multi-tile reduction with the 2-way split grid.
    loss = jax.block_until_ready(hybrid_memory_loss(
        inputs, features, labels, indexes, temp=temp, tile_n=128,
        bank_dtype=jnp.float32, compute_dtype=jnp.float32, num_splits=2))
    ref = jax.block_until_ready(reference_loss(inputs, features, labels, indexes, temp))
    assert np.allclose(np.asarray(loss), np.asarray(ref), rtol=1e-4, atol=1e-4), (loss, ref)

    # 2) default path (bf16 bank + bf16 MXU operands) with N not a multiple of
    #    tile_n -- exercises the host-side zero-row padding.
    N2 = 500
    idx2 = jnp.clip(indexes, 0, N2 - 1)
    loss2 = jax.block_until_ready(hybrid_memory_loss(
        inputs, features[:N2], labels[:N2], idx2, temp=temp, tile_n=128))
    ref2 = jax.block_until_ready(reference_loss(
        inputs, features[:N2], labels[:N2], idx2, temp,
        bank_dtype=jnp.bfloat16, compute_dtype=jnp.bfloat16))
    assert np.allclose(np.asarray(loss2), np.asarray(ref2), rtol=2e-3, atol=2e-3), (loss2, ref2)

    # 3) fully-default call: auto tile_n (VMEM-budget derived), num_splits clamps
    #    to the tile count, bf16 bank + bf16 MXU operands.
    loss3 = jax.block_until_ready(hybrid_memory_loss(
        inputs, features, labels, indexes, temp=temp))
    ref3 = jax.block_until_ready(reference_loss(
        inputs, features, labels, indexes, temp,
        bank_dtype=jnp.bfloat16, compute_dtype=jnp.bfloat16))
    assert np.allclose(np.asarray(loss3), np.asarray(ref3), rtol=2e-3, atol=2e-3), (loss3, ref3)

    print("KERNEL_OK")
</pallas_src>

<mosaic_0001>
module attributes {stable_mosaic.version = 11 : i64} {
  func.func @kernel(%arg0: i32, %arg1: i32, %arg2: memref<128x128xf32, #tpu.memory_space<vmem>>, %arg3: memref<128x1xi32, #tpu.memory_space<vmem>>, %arg4: memref<1x128x128xf32, #tpu.memory_space<vmem>>) attributes {dimension_semantics = [#tpu.dimension_semantics<parallel>, #tpu.dimension_semantics<arbitrary>], iteration_bounds = array<i64: 2, 2>, scalar_prefetch = 0 : i64, scratch_operands = 0 : i64, tpu.core_type = #tpu.core_type<tc>, window_params = [{transform_indices = @transform_0, window_bounds = array<i64: 128, 128>}, {transform_indices = @transform_1, window_bounds = array<i64: 128, 1>}, {transform_indices = @transform_2, window_bounds = array<i64: 1, 128, 128>}]} {
    %c0_i32 = arith.constant 0 : i32
    %0 = arith.cmpi eq, %arg1, %c0_i32 : i32
    %1 = arith.extui %0 : i1 to i32
    %c0_i32_0 = arith.constant 0 : i32
    %2 = arith.cmpi ne, %1, %c0_i32_0 : i32
    scf.if %2 {
      %cst_12 = arith.constant 0.000000e+00 : f32
      %26 = vector.broadcast %cst_12 : f32 to vector<1x128x128xf32>
      %c0_13 = arith.constant 0 : index
      %c0_14 = arith.constant 0 : index
      %c0_15 = arith.constant 0 : index
      %27 = vector.load %arg4[%c0_13, %c0_14, %c0_15] : memref<1x128x128xf32, #tpu.memory_space<vmem>>, vector<1x128x128xf32>
      tpu.vector_store %arg4[%c0_13, %c0_14, %c0_15], %26 {strides = array<i32>} : memref<1x128x128xf32, #tpu.memory_space<vmem>>, vector<1x128x128xf32>,
    } else {
    }
    %c0 = arith.constant 0 : index
    %c0_1 = arith.constant 0 : index
    %3 = vector.load %arg2[%c0, %c0_1] : memref<128x128xf32, #tpu.memory_space<vmem>>, vector<128x128xf32>
    %4 = arith.mulf %3, %3 : vector<128x128xf32>
    %cst = arith.constant dense<0.000000e+00> : vector<128xf32>
    %5 = vector.multi_reduction <add>, %4, %cst [1] : vector<128x128xf32> to vector<128xf32>
    %6 = vector.shape_cast %5 : vector<128xf32> to vector<128x1xf32>
    %cst_2 = arith.constant 1.000000e-24 : f32
    %7 = vector.broadcast %cst_2 : f32 to vector<128x1xf32>
    %8 = arith.maximumf %6, %7 : vector<128x1xf32>
    %9 = math.rsqrt %8 : vector<128x1xf32>
    %10 = vector.broadcast %9 : vector<128x1xf32> to vector<128x128xf32>
    %11 = arith.mulf %3, %10 : vector<128x128xf32>
    %12 = tpu.iota {dimensions = array<i32: 1>} : vector<1x128xi32>
    %c0_3 = arith.constant 0 : index
    %c0_4 = arith.constant 0 : index
    %13 = vector.load %arg3[%c0_3, %c0_4] : memref<128x1xi32, #tpu.memory_space<vmem>>, vector<128x1xi32>
    %14 = vector.broadcast %13 : vector<128x1xi32> to vector<128x128xi32>
    %15 = vector.broadcast %12 : vector<1x128xi32> to vector<128x128xi32>
    %16 = arith.cmpi eq, %14, %15 : vector<128x128xi32>
    %17 = arith.extui %16 : vector<128x128xi1> to vector<128x128xi32>
    %18 = arith.sitofp %17 : vector<128x128xi32> to vector<128x128xf32>
    %c0_5 = arith.constant 0 : index
    %c0_6 = arith.constant 0 : index
    %c0_7 = arith.constant 0 : index
    %19 = vector.load %arg4[%c0_5, %c0_6, %c0_7] : memref<1x128x128xf32, #tpu.memory_space<vmem>>, vector<1x128x128xf32>
    %20 = vector.shape_cast %19 : vector<1x128x128xf32> to vector<128x128xf32>
    %cst_8 = arith.constant dense<0.000000e+00> : vector<128x128xf32>
    %21 = tpu.matmul %11, %18, %cst_8 {dimension_numbers = #tpu.dot_dimension_numbers<[0], [0], [1], [1], [0, 1, 1, 1], [], []>} : vector<128x128xf32>, vector<128x128xf32>, vector<128x128xf32> -> vector<128x128xf32>
    %22 = arith.addf %20, %21 : vector<128x128xf32>
    %c0_9 = arith.constant 0 : index
    %c0_10 = arith.constant 0 : index
    %c0_11 = arith.constant 0 : index
    %23 = vector.load %arg4[%c0_9, %c0_10, %c0_11] : memref<1x128x128xf32, #tpu.memory_space<vmem>>, vector<1x128x128xf32>
    %24 = vector.shape_cast %23 : vector<1x128x128xf32> to vector<128x128xf32>
    %25 = vector.shape_cast %22 : vector<128x128xf32> to vector<1x128x128xf32>
    tpu.vector_store %arg4[%c0_9, %c0_10, %c0_11], %25 {strides = array<i32>} : memref<1x128x128xf32, #tpu.memory_space<vmem>>, vector<1x128x128xf32>,
    return
  }
  func.func @transform_0(%arg0: i32, %arg1: i32) -> (i32, i32) {
    %c2_i32 = arith.constant 2 : i32
    %0 = arith.muli %arg0, %c2_i32 : i32
    %1 = arith.addi %0, %arg1 : i32
    %c0_i32 = arith.constant 0 : i32
    %c0_i32_0 = arith.constant 0 : i32
    return %1, %c0_i32 : i32, i32
  }
  func.func @transform_1(%arg0: i32, %arg1: i32) -> (i32, i32) {
    %c2_i32 = arith.constant 2 : i32
    %0 = arith.muli %arg0, %c2_i32 : i32
    %1 = arith.addi %0, %arg1 : i32
    %c0_i32 = arith.constant 0 : i32
    %c0_i32_0 = arith.constant 0 : i32
    return %1, %c0_i32 : i32, i32
  }
  func.func @transform_2(%arg0: i32, %arg1: i32) -> (i32, i32, i32) {
    %c0_i32 = arith.constant 0 : i32
    %c0_i32_0 = arith.constant 0 : i32
    %c0_i32_1 = arith.constant 0 : i32
    return %arg0, %c0_i32, %c0_i32_0 : i32, i32, i32
  }
}

</mosaic_0001>

<llo_original>
// kernel: tpu_custom_call.1
$region0: #{tpu_custom_call.1}
  #allocation0 [shape = 'u32[]', space=smem, size = 0x4, offset = 0x4, fixed_abs, tag = 'smem constant byte address 0x4 - core index']
  #allocation1 [shape = 'u32[144,128]{1,0:T(1,128)}', space=vmem, size = 0x12000, scoped, tag = 'internal scratch']
  %s0 = inlined_call_operand.vmem [shape: f32[512,128], index: 0, kind: input, shape index: {}]
  %s1 = inlined_call_operand.vmem [shape: s32[512,1], index: 1, kind: input, shape index: {}]
  %s2 = inlined_call_operand.hbm [shape: f32[2,128,128], index: 2, kind: output, shape index: {}]
  %s3 = sld [smem:[#allocation0]]
  $region45: #{tpu_custom_call.1} parent=0
    _
  %s5 = ssub.s32 1, %s3
  %s6 = scalar_select 0, %s5, %s3
  $region1: #{tpu_custom_call.1} parent=0
    #allocation2 [shape = 'u8[131072]{0}', space=vmem, size = 0x20000, scoped, tag = 'output window, operand 0']
    #allocation3 [shape = 's32[2]{0}', space=sflag, size = 0x8, scoped, tag = 'scoped memory for tpu_custom_call.1']
    %7 = vsyncpa [#allocation3], 0
    %s8 = scalar_lea.sflag [#allocation3], 1
    %9 = vsyncpa %s8, 0
    loop: start=0, step=1, limit=6
    $region2: #{tpu_custom_call.1} parent=1 // loop_pre_header
      _
    $region3: #{tpu_custom_call.1} parent=1 // loop_header
      %s11 = sphi 0, %s15
      %p12 = scmp.ge.s32.totalorder %s11, 6
      %s18 = sphi 0, %s30
      %s19 = sphi 0, %s26
      %s20 = sphi 0, %s18
      %s21 = sphi 0, %s19
      %s22 = sphi 0, %s20
      %s23 = sphi 0, %s21
      %s37 = sphi 0, %s39
      %s40 = sphi 0, %s37
      %s41 = sphi 0, %s40
      %s57 = sphi 0, %s41
      %s67 = sphi 0, %s69
      %s70 = sphi 0, %s67
      %s71 = sphi 0, %s70
      %s87 = sphi 0, %s71
      %s93 = sphi 0, %s95
      %s96 = sphi 0, %s93
      %s97 = sphi 0, %s96
      %s113 = sphi 0, %s97
    $region4: #{tpu_custom_call.1} parent=1 // loop_header_branch
      %14 = sbr.rel (%p12) target = $region8
    $region5: #{tpu_custom_call.1} parent=1 // loop_body
      %s16 = ssub.s32 %s11, 1
      %s17 = ssub.s32 %s11, 2
      %s24 = sadd.s32 1, %s19
      %p25 = scmp.ge.s32.totalorder %s24, 2
      %s26 = scalar_select %p25, 0, %s24
      %s27 = sadd.s32 1, %s18
      %s28 = scalar_select %p25, %s27, %s18
      %p29 = scmp.ge.s32.totalorder %s28, 2
      %s30 = scalar_select %p29, 0, %s28
      %s31 = smul.u32 %s18, 2
      %s32 = sadd.s32 %s31, %s19
      %s33 = smul.u32 %s30, 2
      %s34 = sadd.s32 %s33, %s26
      %s35 = ssub.s32 %s32, %s34
      %p36 = scmp.eq.s32.totalorder %s35, 0
      %s38 = sadd.s32 %s37, 1
      %s39 = scalar_select %p36, %s37, %s38
      %p42 = pneg %p36
      %p43 = scmp.eq.s32.totalorder %s11, 3
      %p44 = por %p42, %p43
      %p45 = scmp.ne.s32.totalorder %s37, %s40
      %p46 = scmp.eq.s32.totalorder %s11, 0
      %p47 = por %p45, %p46
      %p48 = scmp.ne.s32.totalorder %s37, %s40
      %p49 = scmp.eq.s32.totalorder %s16, 3
      %p50 = por %p48, %p49
      %p51 = scmp.ne.s32.totalorder %s40, %s41
      %p52 = scmp.eq.s32.totalorder %s16, 0
      %p53 = por %p51, %p52
      %p54 = scmp.ne.s32.totalorder %s40, %s41
      %p55 = scmp.eq.s32.totalorder %s17, 3
      %p56 = por %p54, %p55
      %p58 = scmp.ne.s32.totalorder %s41, %s57
      %p59 = scmp.eq.s32.totalorder %s17, 0
      %p60 = por %p58, %p59
      %s61 = smul.u32 %s18, 2
      %s62 = sadd.s32 %s61, %s19
      %s63 = smul.u32 %s30, 2
      %s64 = sadd.s32 %s63, %s26
      %s65 = ssub.s32 %s62, %s64
      %p66 = scmp.eq.s32.totalorder %s65, 0
      %s68 = sadd.s32 %s67, 1
      %s69 = scalar_select %p66, %s67, %s68
      %p72 = pneg %p66
      %p73 = scmp.eq.s32.totalorder %s11, 3
      %p74 = por %p72, %p73
      %p75 = scmp.ne.s32.totalorder %s67, %s70
      %p76 = scmp.eq.s32.totalorder %s11, 0
      %p77 = por %p75, %p76
      %p78 = scmp.ne.s32.totalorder %s67, %s70
      %p79 = scmp.eq.s32.totalorder %s16, 3
      %p80 = por %p78, %p79
      %p81 = scmp.ne.s32.totalorder %s70, %s71
      %p82 = scmp.eq.s32.totalorder %s16, 0
      %p83 = por %p81, %p82
      %p84 = scmp.ne.s32.totalorder %s70, %s71
      %p85 = scmp.eq.s32.totalorder %s17, 3
      %p86 = por %p84, %p85
      %p88 = scmp.ne.s32.totalorder %s71, %s87
      %p89 = scmp.eq.s32.totalorder %s17, 0
      %p90 = por %p88, %p89
      %s91 = ssub.s32 %s18, %s30
      %p92 = scmp.eq.s32.totalorder %s91, 0
      %s94 = sadd.s32 %s93, 1
      %s95 = scalar_select %p92, %s93, %s94
      %p98 = pneg %p92
      %p99 = scmp.eq.s32.totalorder %s11, 3
      %p100 = por %p98, %p99
      %p101 = scmp.ne.s32.totalorder %s93, %s96
      %p102 = scmp.eq.s32.totalorder %s11, 0
      %p103 = por %p101, %p102
      %p104 = scmp.ne.s32.totalorder %s93, %s96
      %p105 = scmp.eq.s32.totalorder %s16, 3
      %p106 = por %p104, %p105
      %p107 = scmp.ne.s32.totalorder %s96, %s97
      %p108 = scmp.eq.s32.totalorder %s16, 0
      %p109 = por %p107, %p108
      %p110 = scmp.ne.s32.totalorder %s96, %s97
      %p111 = scmp.eq.s32.totalorder %s17, 3
      %p112 = por %p110, %p111
      %p114 = scmp.ne.s32.totalorder %s97, %s113
      %p115 = scmp.eq.s32.totalorder %s17, 0
      %p116 = por %p114, %p115
      %p117 = scmp.le.s32.totalorder 1, %s11
      %p118 = scmp.lt.s32.totalorder %s11, 5
      %p119 = pnand %p117, %p118
      %p120 = pneg %p119
      // Predicated region
      $region9: #{tpu_custom_call.1} parent=5 // pred_check
        _
      $region10: #{tpu_custom_call.1} parent=5 // pred_check_branch
        %122 = sbr.rel (%p119) target = $region12
      $region11: #{tpu_custom_call.1} parent=5 // pred_region
        %s123 = ssub.s32 %s11, 1
      $region12: #{tpu_custom_call.1} parent=5 // pred_fallthru
        _
      %p124 = scmp.lt.s32.totalorder %s11, 4
      // Predicated region
      $region13: #{tpu_custom_call.1} parent=5 // pred_check
        %p125 = pneg %p124
      $region14: #{tpu_custom_call.1} parent=5 // pred_check_branch
        %127 = sbr.rel (%p125) target = $region16
      $region15: #{tpu_custom_call.1} parent=5 // pred_region
        // Predicated region
        $region17: #{tpu_custom_call.1} parent=15 // pred_check
          %p128 = pneg %p47
        $region18: #{tpu_custom_call.1} parent=15 // pred_check_branch
          %130 = sbr.rel (%p128) target = $region20
        $region19: #{tpu_custom_call.1} parent=15 // pred_region
          %s131 = smul.u32 %s18, 2
          %s132 = sadd.s32 %s131, %s19
          %s133 = smul.u32 16, %s132
          %p134 = scmp.lt.s32.totalorder %s133, 63
          %s135 = scalar_select %p134, %s133, 63
          %s136 = smul.addr %s135, 8
          %s137 = scalar_lea.vmem %s0, %s136
          %s138 = smul.u32 %s18, 2
          %s139 = sadd.s32 %s138, %s19
          %s140 = smul.u32 16, %s139
        $region20: #{tpu_custom_call.1} parent=15 // pred_fallthru
          _
        // Predicated region
        $region21: #{tpu_custom_call.1} parent=15 // pred_check
          %p141 = pneg %p77
        $region22: #{tpu_custom_call.1} parent=15 // pred_check_branch
          %143 = sbr.rel (%p141) target = $region24
        $region23: #{tpu_custom_call.1} parent=15 // pred_region
          %s144 = smul.u32 %s18, 2
          %s145 = sadd.s32 %s144, %s19
          %s146 = smul.u32 16, %s145
          %p147 = scmp.lt.s32.totalorder %s146, 63
          %s148 = scalar_select %p147, %s146, 63
          %s149 = smul.addr %s148, 8
          %s150 = scalar_lea.vmem %s1, %s149
          %s151 = smul.u32 %s18, 2
          %s152 = sadd.s32 %s151, %s19
          %s153 = smul.u32 16, %s152
        $region24: #{tpu_custom_call.1} parent=15 // pred_fallthru
          _
      $region16: #{tpu_custom_call.1} parent=5 // pred_fallthru
        _
      %p154 = scmp.le.s32.totalorder 1, %s11
      %p155 = scmp.lt.s32.totalorder %s11, 5
      %p156 = pnand %p154, %p155
      %p157 = pneg %p156
      // Predicated region
      $region25: #{tpu_custom_call.1} parent=5 // pred_check
        _
      $region26: #{tpu_custom_call.1} parent=5 // pred_check_branch
        %159 = sbr.rel (%p156) target = $region28
      $region27: #{tpu_custom_call.1} parent=5 // pred_region
        %s160 = ssub.s32 %s11, 1
        %s161 = smul.u32 %s20, 2
        %s162 = sadd.s32 %s161, %s21
        %s163 = smul.u32 16, %s162
        %p164 = scmp.lt.s32.totalorder %s163, 63
        %s165 = scalar_select %p164, %s163, 63
        %s166 = smul.addr %s165, 8
        %s167 = scalar_lea.vmem %s0, %s166
        %p168 = pneg %p53
        %p169 = pneg %p50
        %s170 = smul.u32 %s20, 2
        %s171 = sadd.s32 %s170, %s21
        %s172 = smul.u32 16, %s171
        %p173 = scmp.lt.s32.totalorder %s172, 63
        %s174 = scalar_select %p173, %s172, 63
        %s175 = smul.addr %s174, 8
        %s176 = scalar_lea.vmem %s1, %s175
        %p177 = pneg %p83
        %p178 = pneg %p80
        %p179 = pneg %p109
        %p180 = pneg %p106
        %s181 = sand.u32 %s96, 1
        %s182 = scalar_lea.sflag [#allocation3], %s181
        %s183 = sand.u32 %s96, 1
        %s184 = smul.addr %s183, 128
        %s185 = scalar_lea.vmem [#allocation2], %s184
        %s186 = smul.u32 %s20, 2
        %s187 = sadd.s32 %s186, %s21
        %s188 = smul.u32 16, %s187
        %p189 = scmp.lt.s32.totalorder %s188, 63
        %s190 = scalar_select %p189, %s188, 63
        %s191 = smul.addr %s190, 8
        %s192 = scalar_lea.vmem %s0, %s191
        %s193 = smul.u32 %s20, 2
        %s194 = sadd.s32 %s193, %s21
        %s195 = smul.u32 16, %s194
        %s196 = smul.u32 %s20, 2
        %s197 = sadd.s32 %s196, %s21
        %s198 = smul.u32 16, %s197
        %p199 = scmp.lt.s32.totalorder %s198, 63
        %s200 = scalar_select %p199, %s198, 63
        %s201 = smul.addr %s200, 8
        %s202 = scalar_lea.vmem %s1, %s201
        %s203 = smul.u32 %s20, 2
        %s204 = sadd.s32 %s203, %s21
        %s205 = smul.u32 16, %s204
        %p206 = scmp.eq.s32.totalorder %s21, 0
        // Predicated region
        $region29: #{tpu_custom_call.1} parent=27 // pred_check
          %p207 = pneg %p206
        $region30: #{tpu_custom_call.1} parent=27 // pred_check_branch
          %209 = sbr.rel (%p207) target = $region32
        $region31: #{tpu_custom_call.1} parent=27 // pred_region
          %210 = vst [vmem:[%s185] sm:$0xff] 0.0
          %211 = vst [vmem:[%s185 + $0x8] sm:$0xff] 0.0
          %212 = vst [vmem:[%s185 + $0x10] sm:$0xff] 0.0
          %213 = vst [vmem:[%s185 + $0x18] sm:$0xff] 0.0
          %214 = vst [vmem:[%s185 + $0x20] sm:$0xff] 0.0
          %215 = vst [vmem:[%s185 + $0x28] sm:$0xff] 0.0
          %216 = vst [vmem:[%s185 + $0x30] sm:$0xff] 0.0
          %217 = vst [vmem:[%s185 + $0x38] sm:$0xff] 0.0
          %218 = vst [vmem:[%s185 + $0x40] sm:$0xff] 0.0
          %219 = vst [vmem:[%s185 + $0x48] sm:$0xff] 0.0
          %220 = vst [vmem:[%s185 + $0x50] sm:$0xff] 0.0
          %221 = vst [vmem:[%s185 + $0x58] sm:$0xff] 0.0
          %222 = vst [vmem:[%s185 + $0x60] sm:$0xff] 0.0
          %223 = vst [vmem:[%s185 + $0x68] sm:$0xff] 0.0
          %224 = vst [vmem:[%s185 + $0x70] sm:$0xff] 0.0
          %225 = vst [vmem:[%s185 + $0x78] sm:$0xff] 0.0
        $region32: #{tpu_custom_call.1} parent=27 // pred_fallthru
          _
        %v226 = vld [vmem:[%s192] sm:$0xff]
        %v227 = vld [vmem:[%s192 + $0x8] sm:$0xff]
        %v228 = vld [vmem:[%s192 + $0x10] sm:$0xff]
        %v229 = vld [vmem:[%s192 + $0x18] sm:$0xff]
        %v230 = vld [vmem:[%s192 + $0x20] sm:$0xff]
        %v231 = vld [vmem:[%s192 + $0x28] sm:$0xff]
        %v232 = vld [vmem:[%s192 + $0x30] sm:$0xff]
        %v233 = vld [vmem:[%s192 + $0x38] sm:$0xff]
        %v234 = vld [vmem:[%s192 + $0x40] sm:$0xff]
        %v235 = vld [vmem:[%s192 + $0x48] sm:$0xff]
        %v236 = vld [vmem:[%s192 + $0x50] sm:$0xff]
        %v237 = vld [vmem:[%s192 + $0x58] sm:$0xff]
        %v238 = vld [vmem:[%s192 + $0x60] sm:$0xff]
        %v239 = vld [vmem:[%s192 + $0x68] sm:$0xff]
        %v240 = vld [vmem:[%s192 + $0x70] sm:$0xff]
        %v241 = vld [vmem:[%s192 + $0x78] sm:$0xff]
        %v242 = vmul.f32 %v226, %v226
        %v243 = vmul.f32 %v227, %v227
        %v244 = vmul.f32 %v228, %v228
        %v245 = vmul.f32 %v229, %v229
        %v246 = vmul.f32 %v230, %v230
        %v247 = vmul.f32 %v231, %v231
        %v248 = vmul.f32 %v232, %v232
        %v249 = vmul.f32 %v233, %v233
        %v250 = vmul.f32 %v234, %v234
        %v251 = vmul.f32 %v235, %v235
        %v252 = vmul.f32 %v236, %v236
        %v253 = vmul.f32 %v237, %v237
        %v254 = vmul.f32 %v238, %v238
        %v255 = vmul.f32 %v239, %v239
        %v256 = vmul.f32 %v240, %v240
        %v257 = vmul.f32 %v241, %v241
        %258 = vadd.xlane.f32.xlu0 %v242
        %v259 = vpop.xlane.xlu0 %258
        %260 = vadd.xlane.f32.xlu0 %v243
        %v261 = vpop.xlane.xlu0 %260
        %262 = vadd.xlane.f32.xlu0 %v244
        %v263 = vpop.xlane.xlu0 %262
        %264 = vadd.xlane.f32.xlu0 %v245
        %v265 = vpop.xlane.xlu0 %264
        %266 = vadd.xlane.f32.xlu0 %v246
        %v267 = vpop.xlane.xlu0 %266
        %268 = vadd.xlane.f32.xlu0 %v247
        %v269 = vpop.xlane.xlu0 %268
        %270 = vadd.xlane.f32.xlu0 %v248
        %v271 = vpop.xlane.xlu0 %270
        %272 = vadd.xlane.f32.xlu0 %v249
        %v273 = vpop.xlane.xlu0 %272
        %274 = vadd.xlane.f32.xlu0 %v250
        %v275 = vpop.xlane.xlu0 %274
        %276 = vadd.xlane.f32.xlu0 %v251
        %v277 = vpop.xlane.xlu0 %276
        %278 = vadd.xlane.f32.xlu0 %v252
        %v279 = vpop.xlane.xlu0 %278
        %280 = vadd.xlane.f32.xlu0 %v253
        %v281 = vpop.xlane.xlu0 %280
        %282 = vadd.xlane.f32.xlu0 %v254
        %v283 = vpop.xlane.xlu0 %282
        %284 = vadd.xlane.f32.xlu0 %v255
        %v285 = vpop.xlane.xlu0 %284
        %286 = vadd.xlane.f32.xlu0 %v256
        %v287 = vpop.xlane.xlu0 %286
        %288 = vadd.xlane.f32.xlu0 %v257
        %v289 = vpop.xlane.xlu0 %288
        %v290 = vmax.f32 %v259, 1e-24
        %v291 = vmax.f32 %v261, 1e-24
        %v292 = vmax.f32 %v263, 1e-24
        %v293 = vmax.f32 %v265, 1e-24
        %v294 = vmax.f32 %v267, 1e-24
        %v295 = vmax.f32 %v269, 1e-24
        %v296 = vmax.f32 %v271, 1e-24
        %v297 = vmax.f32 %v273, 1e-24
        %v298 = vmax.f32 %v275, 1e-24
        %v299 = vmax.f32 %v277, 1e-24
        %v300 = vmax.f32 %v279, 1e-24
        %v301 = vmax.f32 %v281, 1e-24
        %v302 = vmax.f32 %v283, 1e-24
        %v303 = vmax.f32 %v285, 1e-24
        %v304 = vmax.f32 %v287, 1e-24
        %v305 = vmax.f32 %v289, 1e-24
        %v306 = vrsqrt.pop %v290
        %v307 = vrsqrt.pop %v291
        %v308 = vrsqrt.pop %v292
        %v309 = vrsqrt.pop %v293
        %v310 = vrsqrt.pop %v294
        %v311 = vrsqrt.pop %v295
        %v312 = vrsqrt.pop %v296
        %v313 = vrsqrt.pop %v297
        %v314 = vrsqrt.pop %v298
        %v315 = vrsqrt.pop %v299
        %v316 = vrsqrt.pop %v300
        %v317 = vrsqrt.pop %v301
        %v318 = vrsqrt.pop %v302
        %v319 = vrsqrt.pop %v303
        %v320 = vrsqrt.pop %v304
        %v321 = vrsqrt.pop %v305
        %v322 = vmul.f32 %v226, %v306
        %v323 = vmul.f32 %v227, %v307
        %v324 = vmul.f32 %v228, %v308
        %v325 = vmul.f32 %v229, %v309
        %v326 = vmul.f32 %v230, %v310
        %v327 = vmul.f32 %v231, %v311
        %v328 = vmul.f32 %v232, %v312
        %v329 = vmul.f32 %v233, %v313
        %v330 = vmul.f32 %v234, %v314
        %v331 = vmul.f32 %v235, %v315
        %v332 = vmul.f32 %v236, %v316
        %v333 = vmul.f32 %v237, %v317
        %v334 = vmul.f32 %v238, %v318
        %v335 = vmul.f32 %v239, %v319
        %v336 = vmul.f32 %v240, %v320
        %v337 = vmul.f32 %v241, %v321
        %v338 = vlaneseq
        %v339 = vand.u32 %v338, 127
        %v340 = vld [vmem:[%s202] sm:$0xff]
        %v341 = vld [vmem:[%s202 + $0x8] sm:$0xff]
        %v342 = vld [vmem:[%s202 + $0x10] sm:$0xff]
        %v343 = vld [vmem:[%s202 + $0x18] sm:$0xff]
        %v344 = vld [vmem:[%s202 + $0x20] sm:$0xff]
        %v345 = vld [vmem:[%s202 + $0x28] sm:$0xff]
        %v346 = vld [vmem:[%s202 + $0x30] sm:$0xff]
        %v347 = vld [vmem:[%s202 + $0x38] sm:$0xff]
        %v348 = vld [vmem:[%s202 + $0x40] sm:$0xff]
        %v349 = vld [vmem:[%s202 + $0x48] sm:$0xff]
        %v350 = vld [vmem:[%s202 + $0x50] sm:$0xff]
        %v351 = vld [vmem:[%s202 + $0x58] sm:$0xff]
        %v352 = vld [vmem:[%s202 + $0x60] sm:$0xff]
        %v353 = vld [vmem:[%s202 + $0x68] sm:$0xff]
        %v354 = vld [vmem:[%s202 + $0x70] sm:$0xff]
        %v355 = vld [vmem:[%s202 + $0x78] sm:$0xff]
        %356 = vset.pattern.permute.xlu0 0
        %357 = vperm.xlu0 %356, %v340
        %v358 = vpop.permute.xlu0 %357
        %359 = vset.pattern.permute.xlu0 0
        %360 = vperm.xlu0 %359, %v341
        %v361 = vpop.permute.xlu0 %360
        %362 = vset.pattern.permute.xlu0 0
        %363 = vperm.xlu0 %362, %v342
        %v364 = vpop.permute.xlu0 %363
        %365 = vset.pattern.permute.xlu0 0
        %366 = vperm.xlu0 %365, %v343
        %v367 = vpop.permute.xlu0 %366
        %368 = vset.pattern.permute.xlu0 0
        %369 = vperm.xlu0 %368, %v344
        %v370 = vpop.permute.xlu0 %369
        %371 = vset.pattern.permute.xlu0 0
        %372 = vperm.xlu0 %371, %v345
        %v373 = vpop.permute.xlu0 %372
        %374 = vset.pattern.permute.xlu0 0
        %375 = vperm.xlu0 %374, %v346
        %v376 = vpop.permute.xlu0 %375
        %377 = vset.pattern.permute.xlu0 0
        %378 = vperm.xlu0 %377, %v347
        %v379 = vpop.permute.xlu0 %378
        %380 = vset.pattern.permute.xlu0 0
        %381 = vperm.xlu0 %380, %v348
        %v382 = vpop.permute.xlu0 %381
        %383 = vset.pattern.permute.xlu0 0
        %384 = vperm.xlu0 %383, %v349
        %v385 = vpop.permute.xlu0 %384
        %386 = vset.pattern.permute.xlu0 0
        %387 = vperm.xlu0 %386, %v350
        %v388 = vpop.permute.xlu0 %387
        %389 = vset.pattern.permute.xlu0 0
        %390 = vperm.xlu0 %389, %v351
        %v391 = vpop.permute.xlu0 %390
        %392 = vset.pattern.permute.xlu0 0
        %393 = vperm.xlu0 %392, %v352
        %v394 = vpop.permute.xlu0 %393
        %395 = vset.pattern.permute.xlu0 0
        %396 = vperm.xlu0 %395, %v353
        %v397 = vpop.permute.xlu0 %396
        %398 = vset.pattern.permute.xlu0 0
        %399 = vperm.xlu0 %398, %v354
        %v400 = vpop.permute.xlu0 %399
        %401 = vset.pattern.permute.xlu0 0
        %402 = vperm.xlu0 %401, %v355
        %v403 = vpop.permute.xlu0 %402
        %vm404 = vcmp.eq.s32.totalorder %v358, %v339
        %vm405 = vcmp.eq.s32.totalorder %v361, %v339
        %vm406 = vcmp.eq.s32.totalorder %v364, %v339
        %vm407 = vcmp.eq.s32.totalorder %v367, %v339
        %vm408 = vcmp.eq.s32.totalorder %v370, %v339
        %vm409 = vcmp.eq.s32.totalorder %v373, %v339
        %vm410 = vcmp.eq.s32.totalorder %v376, %v339
        %vm411 = vcmp.eq.s32.totalorder %v379, %v339
        %vm412 = vcmp.eq.s32.totalorder %v382, %v339
        %vm413 = vcmp.eq.s32.totalorder %v385, %v339
        %vm414 = vcmp.eq.s32.totalorder %v388, %v339
        %vm415 = vcmp.eq.s32.totalorder %v391, %v339
        %vm416 = vcmp.eq.s32.totalorder %v394, %v339
        %vm417 = vcmp.eq.s32.totalorder %v397, %v339
        %vm418 = vcmp.eq.s32.totalorder %v400, %v339
        %vm419 = vcmp.eq.s32.totalorder %v403, %v339
        %v420 = vsel %vm404, 1, 0
        %v421 = vsel %vm405, 1, 0
        %v422 = vsel %vm406, 1, 0
        %v423 = vsel %vm407, 1, 0
        %v424 = vsel %vm408, 1, 0
        %v425 = vsel %vm409, 1, 0
        %v426 = vsel %vm410, 1, 0
        %v427 = vsel %vm411, 1, 0
        %v428 = vsel %vm412, 1, 0
        %v429 = vsel %vm413, 1, 0
        %v430 = vsel %vm414, 1, 0
        %v431 = vsel %vm415, 1, 0
        %v432 = vsel %vm416, 1, 0
        %v433 = vsel %vm417, 1, 0
        %v434 = vsel %vm418, 1, 0
        %v435 = vsel %vm419, 1, 0
        %v436 = vcvt.s32.f32 %v420
        %v437 = vcvt.s32.f32 %v421
        %v438 = vcvt.s32.f32 %v422
        %v439 = vcvt.s32.f32 %v423
        %v440 = vcvt.s32.f32 %v424
        %v441 = vcvt.s32.f32 %v425
        %v442 = vcvt.s32.f32 %v426
        %v443 = vcvt.s32.f32 %v427
        %v444 = vcvt.s32.f32 %v428
        %v445 = vcvt.s32.f32 %v429
        %v446 = vcvt.s32.f32 %v430
        %v447 = vcvt.s32.f32 %v431
        %v448 = vcvt.s32.f32 %v432
        %v449 = vcvt.s32.f32 %v433
        %v450 = vcvt.s32.f32 %v434
        %v451 = vcvt.s32.f32 %v435
        %v452 = vld [vmem:[%s185] sm:$0xff]
        %v453 = vld [vmem:[%s185 + $0x8] sm:$0xff]
        %v454 = vld [vmem:[%s185 + $0x10] sm:$0xff]
        %v455 = vld [vmem:[%s185 + $0x18] sm:$0xff]
        %v456 = vld [vmem:[%s185 + $0x20] sm:$0xff]
        %v457 = vld [vmem:[%s185 + $0x28] sm:$0xff]
        %v458 = vld [vmem:[%s185 + $0x30] sm:$0xff]
        %v459 = vld [vmem:[%s185 + $0x38] sm:$0xff]
        %v460 = vld [vmem:[%s185 + $0x40] sm:$0xff]
        %v461 = vld [vmem:[%s185 + $0x48] sm:$0xff]
        %v462 = vld [vmem:[%s185 + $0x50] sm:$0xff]
        %v463 = vld [vmem:[%s185 + $0x58] sm:$0xff]
        %v464 = vld [vmem:[%s185 + $0x60] sm:$0xff]
        %v465 = vld [vmem:[%s185 + $0x68] sm:$0xff]
        %v466 = vld [vmem:[%s185 + $0x70] sm:$0xff]
        %v467 = vld [vmem:[%s185 + $0x78] sm:$0xff]
        %468 = vxpose.xlu0.b32.start [1/16] %v322, 128
        %469 = vxpose.xlu0.b32.cont [2/16] %v323, 128
        %470 = vxpose.xlu0.b32.cont [3/16] %v324, 128
        %471 = vxpose.xlu0.b32.cont [4/16] %v325, 128
        %472 = vxpose.xlu0.b32.cont [5/16] %v326, 128
        %473 = vxpose.xlu0.b32.cont [6/16] %v327, 128
        %474 = vxpose.xlu0.b32.cont [7/16] %v328, 128
        %475 = vxpose.xlu0.b32.cont [8/16] %v329, 128
        %476 = vxpose.xlu0.b32.cont [9/16] %v330, 128
        %477 = vxpose.xlu0.b32.cont [10/16] %v331, 128
        %478 = vxpose.xlu0.b32.cont [11/16] %v332, 128
        %479 = vxpose.xlu0.b32.cont [12/16] %v333, 128
        %480 = vxpose.xlu0.b32.cont [13/16] %v334, 128
        %481 = vxpose.xlu0.b32.cont [14/16] %v335, 128
        %482 = vxpose.xlu0.b32.cont [15/16] %v336, 128
        %483 = vxpose.xlu0.b32.end [16/16] %v337, 128
        %v484 = vpop.trf.xlu0
        %v485 = vpop.trf.xlu0
        %v486 = vpop.trf.xlu0
        %v487 = vpop.trf.xlu0
        %v488 = vpop.trf.xlu0
        %v489 = vpop.trf.xlu0
        %v490 = vpop.trf.xlu0
        %v491 = vpop.trf.xlu0
        %v492 = vpop.trf.xlu0
        %v493 = vpop.trf.xlu0
        %v494 = vpop.trf.xlu0
        %v495 = vpop.trf.xlu0
        %v496 = vpop.trf.xlu0
        %v497 = vpop.trf.xlu0
        %v498 = vpop.trf.xlu0
        %v499 = vpop.trf.xlu0
        %500 = vmatprep.subr.mxu0 0.0
        %501 = vmatpush1.msra.mxu0 %v451
        %502 = vmatprep.subr.mxu0 0.0
        %503 = vmatpush1.msra.mxu0 %v450
        %504 = vmatprep.subr.mxu0 0.0
        %505 = vmatpush1.msra.mxu0 %v449
        %506 = vmatprep.subr.mxu0 0.0
        %507 = vmatpush1.msra.mxu0 %v448
        %508 = vmatprep.subr.mxu0 0.0
        %509 = vmatpush1.msra.mxu0 %v447
        %510 = vmatprep.subr.mxu0 0.0
        %511 = vmatpush1.msra.mxu0 %v446
        %512 = vmatprep.subr.mxu0 0.0
        %513 = vmatpush1.msra.mxu0 %v445
        %514 = vmatprep.subr.mxu0 0.0
        %515 = vmatpush1.msra.mxu0 %v444
        %516 = vmatprep.subr.mxu0 0.0
        %517 = vmatpush1.msra.mxu0 %v443
        %518 = vmatprep.subr.mxu0 0.0
        %519 = vmatpush1.msra.mxu0 %v442
        %520 = vmatprep.subr.mxu0 0.0
        %521 = vmatpush1.msra.mxu0 %v441
        %522 = vmatprep.subr.mxu0 0.0
        %523 = vmatpush1.msra.mxu0 %v440
        %524 = vmatprep.subr.mxu0 0.0
        %525 = vmatpush1.msra.mxu0 %v439
        %526 = vmatprep.subr.mxu0 0.0
        %527 = vmatpush1.msra.mxu0 %v438
        %528 = vmatprep.subr.mxu0 0.0
        %529 = vmatpush1.msra.mxu0 %v437
        %530 = vmatprep.subr.mxu0 0.0
        %531 = vmatpush1.msra.mxu0 %v436
        %532 = vmatprep.subr.mxu0 0.0
        %533 = vmatpush2.msra.mxu0 0.0
        %534 = vmatprep.subr.mxu0 0.0
        %535 = vmatpush2.msra.mxu0 0.0
        %536 = vmatprep.subr.mxu0 0.0
        %537 = vmatpush2.msra.mxu0 0.0
        %538 = vmatprep.subr.mxu0 0.0
        %539 = vmatpush2.msra.mxu0 0.0
        %540 = vmatprep.subr.mxu0 0.0
        %541 = vmatpush2.msra.mxu0 0.0
        %542 = vmatprep.subr.mxu0 0.0
        %543 = vmatpush2.msra.mxu0 0.0
        %544 = vmatprep.subr.mxu0 0.0
        %545 = vmatpush2.msra.mxu0 0.0
        %546 = vmatprep.subr.mxu0 0.0
        %547 = vmatpush2.msra.mxu0 0.0
        %548 = vmatprep.subr.mxu0 0.0
        %549 = vmatpush2.msra.mxu0 0.0
        %550 = vmatprep.subr.mxu0 0.0
        %551 = vmatpush2.msra.mxu0 0.0
        %552 = vmatprep.subr.mxu0 0.0
        %553 = vmatpush2.msra.mxu0 0.0
        %554 = vmatprep.subr.mxu0 0.0
        %555 = vmatpush2.msra.mxu0 0.0
        %556 = vmatprep.subr.mxu0 0.0
        %557 = vmatpush2.msra.mxu0 0.0
        %558 = vmatprep.subr.mxu0 0.0
        %559 = vmatpush2.msra.mxu0 0.0
        %560 = vmatprep.subr.mxu0 0.0
        %561 = vmatpush2.msra.mxu0 0.0
        %562 = vmatprep.subr.mxu0 0.0
        %563 = vmatpush2.msra.mxu0 0.0
        %564 = vmatprep.mubr.f32.mxu0 0.0
        %565 = vmatmul.mubr.f32.gmra.mxu0 %v484
        %v566 = vpop.f32.mrf.mxu0
        %v567 = vadd.f32 0.0, %v566
        %v568 = vpop.f32.mrf.mxu0
        %569 = vmatprep.mubr.f32.mxu0 0.0
        %570 = vmatmul.mubr.f32.gmra.mxu0 %v485
        %v571 = vpop.f32.mrf.mxu0
        %v572 = vadd.f32 0.0, %v571
        %v573 = vpop.f32.mrf.mxu0
        %574 = vmatprep.mubr.f32.mxu0 0.0
        %575 = vmatmul.mubr.f32.gmra.mxu0 %v486
        %v576 = vpop.f32.mrf.mxu0
        %v577 = vadd.f32 0.0, %v576
        %v578 = vpop.f32.mrf.mxu0
        %579 = vmatprep.mubr.f32.mxu0 0.0
        %580 = vmatmul.mubr.f32.gmra.mxu0 %v487
        %v581 = vpop.f32.mrf.mxu0
        %v582 = vadd.f32 0.0, %v581
        %v583 = vpop.f32.mrf.mxu0
        %584 = vmatprep.mubr.f32.mxu0 0.0
        %585 = vmatmul.mubr.f32.gmra.mxu0 %v488
        %v586 = vpop.f32.mrf.mxu0
        %v587 = vadd.f32 0.0, %v586
        %v588 = vpop.f32.mrf.mxu0
        %589 = vmatprep.mubr.f32.mxu0 0.0
        %590 = vmatmul.mubr.f32.gmra.mxu0 %v489
        %v591 = vpop.f32.mrf.mxu0
        %v592 = vadd.f32 0.0, %v591
        %v593 = vpop.f32.mrf.mxu0
        %594 = vmatprep.mubr.f32.mxu0 0.0
        %595 = vmatmul.mubr.f32.gmra.mxu0 %v490
        %v596 = vpop.f32.mrf.mxu0
        %v597 = vadd.f32 0.0, %v596
        %v598 = vpop.f32.mrf.mxu0
        %599 = vmatprep.mubr.f32.mxu0 0.0
        %600 = vmatmul.mubr.f32.gmra.mxu0 %v491
        %v601 = vpop.f32.mrf.mxu0
        %v602 = vadd.f32 0.0, %v601
        %v603 = vpop.f32.mrf.mxu0
        %604 = vmatprep.mubr.f32.mxu0 0.0
        %605 = vmatmul.mubr.f32.gmra.mxu0 %v492
        %v606 = vpop.f32.mrf.mxu0
        %v607 = vadd.f32 0.0, %v606
        %v608 = vpop.f32.mrf.mxu0
        %609 = vmatprep.mubr.f32.mxu0 0.0
        %610 = vmatmul.mubr.f32.gmra.mxu0 %v493
        %v611 = vpop.f32.mrf.mxu0
        %v612 = vadd.f32 0.0, %v611
        %v613 = vpop.f32.mrf.mxu0
        %614 = vmatprep.mubr.f32.mxu0 0.0
        %615 = vmatmul.mubr.f32.gmra.mxu0 %v494
        %v616 = vpop.f32.mrf.mxu0
        %v617 = vadd.f32 0.0, %v616
        %v618 = vpop.f32.mrf.mxu0
        %619 = vmatprep.mubr.f32.mxu0 0.0
        %620 = vmatmul.mubr.f32.gmra.mxu0 %v495
        %v621 = vpop.f32.mrf.mxu0
        %v622 = vadd.f32 0.0, %v621
        %v623 = vpop.f32.mrf.mxu0
        %624 = vmatprep.mubr.f32.mxu0 0.0
        %625 = vmatmul.mubr.f32.gmra.mxu0 %v496
        %v626 = vpop.f32.mrf.mxu0
        %v627 = vadd.f32 0.0, %v626
        %v628 = vpop.f32.mrf.mxu0
        %629 = vmatprep.mubr.f32.mxu0 0.0
        %630 = vmatmul.mubr.f32.gmra.mxu0 %v497
        %v631 = vpop.f32.mrf.mxu0
        %v632 = vadd.f32 0.0, %v631
        %v633 = vpop.f32.mrf.mxu0
        %634 = vmatprep.mubr.f32.mxu0 0.0
        %635 = vmatmul.mubr.f32.gmra.mxu0 %v498
        %v636 = vpop.f32.mrf.mxu0
        %v637 = vadd.f32 0.0, %v636
        %v638 = vpop.f32.mrf.mxu0
        %639 = vmatprep.mubr.f32.mxu0 0.0
        %640 = vmatmul.mubr.f32.gmra.mxu0 %v499
        %v641 = vpop.f32.mrf.mxu0
        %v642 = vadd.f32 0.0, %v641
        %v643 = vpop.f32.mrf.mxu0
        %644 = vdwg.mxu0
        %v645 = vadd.f32 %v452, %v567
        %v646 = vadd.f32 %v453, %v572
        %v647 = vadd.f32 %v454, %v577
        %v648 = vadd.f32 %v455, %v582
        %v649 = vadd.f32 %v456, %v587
        %v650 = vadd.f32 %v457, %v592
        %v651 = vadd.f32 %v458, %v597
        %v652 = vadd.f32 %v459, %v602
        %v653 = vadd.f32 %v460, %v607
        %v654 = vadd.f32 %v461, %v612
        %v655 = vadd.f32 %v462, %v617
        %v656 = vadd.f32 %v463, %v622
        %v657 = vadd.f32 %v464, %v627
        %v658 = vadd.f32 %v465, %v632
        %v659 = vadd.f32 %v466, %v637
        %v660 = vadd.f32 %v467, %v642
        %661 = vst [vmem:[%s185] sm:$0xff] %v645
        %662 = vst [vmem:[%s185 + $0x8] sm:$0xff] %v646
        %663 = vst [vmem:[%s185 + $0x10] sm:$0xff] %v647
        %664 = vst [vmem:[%s185 + $0x18] sm:$0xff] %v648
        %665 = vst [vmem:[%s185 + $0x20] sm:$0xff] %v649
        %666 = vst [vmem:[%s185 + $0x28] sm:$0xff] %v650
        %667 = vst [vmem:[%s185 + $0x30] sm:$0xff] %v651
        %668 = vst [vmem:[%s185 + $0x38] sm:$0xff] %v652
        %669 = vst [vmem:[%s185 + $0x40] sm:$0xff] %v653
        %670 = vst [vmem:[%s185 + $0x48] sm:$0xff] %v654
        %671 = vst [vmem:[%s185 + $0x50] sm:$0xff] %v655
        %672 = vst [vmem:[%s185 + $0x58] sm:$0xff] %v656
        %673 = vst [vmem:[%s185 + $0x60] sm:$0xff] %v657
        %674 = vst [vmem:[%s185 + $0x68] sm:$0xff] %v658
        %675 = vst [vmem:[%s185 + $0x70] sm:$0xff] %v659
        %676 = vst [vmem:[%s185 + $0x78] sm:$0xff] %v660
        %s677 = sand.u32 %s96, 1
        %s678 = scalar_lea.sflag [#allocation3], %s677
        %s679 = sand.u32 %s96, 1
        %s680 = smul.addr %s679, 128
        %s681 = scalar_lea.vmem [#allocation2], %s680
        // Predicated region
        $region33: #{tpu_custom_call.1} parent=27 // pred_check
          %p682 = pneg %p106
        $region34: #{tpu_custom_call.1} parent=27 // pred_check_branch
          %684 = sbr.rel (%p682) target = $region36
        $region35: #{tpu_custom_call.1} parent=27 // pred_region
          %s686 = ssub.s32 2048, 2048
          %687 = vsyncadd %s678, %s686
          %s688 = smul.addr %s20, 16
          %s689 = smul.addr %s688, 128
          %s690 = scalar_lea.hbm %s2, %s689
          %s691 = sshll.u32 %s681, 4
          %s692 = int_to_ptr.vmem [resolvable:$true] %s691
          %697 = dma.vmem_to_hbm [thread:$0]  %s692, 2048, %s690, %s678, 128, 128, 8
        $region36: #{tpu_custom_call.1} parent=27 // pred_fallthru
          _
      $region28: #{tpu_custom_call.1} parent=5 // pred_fallthru
        _
      %p698 = scmp.le.s32.totalorder 2, %s11
      // Predicated region
      $region37: #{tpu_custom_call.1} parent=5 // pred_check
        %p699 = pneg %p698
      $region38: #{tpu_custom_call.1} parent=5 // pred_check_branch
        %701 = sbr.rel (%p699) target = $region40
      $region39: #{tpu_custom_call.1} parent=5 // pred_region
        %s702 = ssub.s32 %s11, 2
        // Predicated region
        $region41: #{tpu_custom_call.1} parent=39 // pred_check
          %p703 = pneg %p112
        $region42: #{tpu_custom_call.1} parent=39 // pred_check_branch
          %705 = sbr.rel (%p703) target = $region44
        $region43: #{tpu_custom_call.1} parent=39 // pred_region
          %s706 = sand.u32 %s97, 1
          %s707 = scalar_lea.sflag [#allocation3], %s706
          %s708 = sand.u32 %s97, 1
          %s709 = smul.addr %s708, 128
          %s710 = scalar_lea.vmem [#allocation2], %s709
          %711 = dma.done %s707, 2048
        $region44: #{tpu_custom_call.1} parent=39 // pred_fallthru
          _
      $region40: #{tpu_custom_call.1} parent=5 // pred_fallthru
        _
    $region6: #{tpu_custom_call.1} parent=1 // loop_footer
      %s15 = sadd.s32 1, %s11
    $region7: #{tpu_custom_call.1} parent=1 // loop_footer_branch
      %10 = sbr.rel target = $region3
    $region8: #{tpu_custom_call.1} parent=1 // loop_exit
      _
    %712 = vsyncpa [#allocation3], 1
    %s713 = scalar_lea.sflag [#allocation3], 1
    %714 = vsyncpa %s713, 1

</llo_original>
